<compile_context>
chip_gen: v7x
topology: tpu7x:2x2x1
jax: 0.10.0
libtpu: 0.0.40
codegen_flags: <defaults>
</compile_context>

<pallas_src>
import jax
import jax.numpy as jnp
from jax import lax
from jax.experimental import pallas as pl
from jax.experimental.pallas import tpu as pltpu

LANES = 128
SUBLANES = 8
CHUNK_ROWS = 512          # rows per inner-loop chunk (256 KiB of f32 per array)


def _device_defaults():
    """(tile_rows, ncores) tuned per TPU generation; conservative fallback."""
    kind = ""
    try:
        kind = jax.devices()[0].device_kind.lower()
    except Exception:
        pass
    # v5e: ~820 GB/s HBM and 16 MiB default scoped VMEM -> 4096-row tiles are
    # plenty (12 MiB double-buffered).  v6e/v7x: 8192-row tiles (24 MiB).
    tile_rows = 4096 if "v5" in kind else 8192
    # Only v7x has 2 TensorCores per chip; on 1-TC chips a second "core" grid
    # index is just a serial duplicate pass (wasted DMA + init/finalize).
    ncores = 2 if "v7" in kind else 1
    return tile_rows, ncores


def _make_kernel(rows, r_blk, steps, chunk):
    """Kernel with static shape constants baked in."""
    assert r_blk % chunk == 0
    n_chunks = r_blk // chunk

    def accum(sq_acc, ms_acc, d, mc):
        if chunk % SUBLANES == 0:
            # Pure-VPU accumulation: fold (chunk,128) -> (8,128) vreg shape;
            # the expensive cross-lane reduce is deferred to the wrapper.
            sq_acc[...] += jnp.sum(
                (d * d).reshape(chunk // SUBLANES, SUBLANES, LANES), axis=0)
            ms_acc[...] += jnp.sum(
                mc.reshape(chunk // SUBLANES, SUBLANES, LANES), axis=0)
        else:
            # Tiny-input fallback (rows < 8 or not a multiple of 8): one small
            # cross-sublane reduce into row 0 of the scratch.
            sq_acc[pl.ds(0, 1), :] += jnp.sum(d * d, axis=0, keepdims=True)
            ms_acc[pl.ds(0, 1), :] += jnp.sum(mc, axis=0, keepdims=True)

    def kernel(x_ref, y_ref, m_ref, out_ref, sq_acc, ms_acc):
        i = pl.program_id(1)

        @pl.when(i == 0)
        def _():
            sq_acc[...] = jnp.zeros_like(sq_acc)
            ms_acc[...] = jnp.zeros_like(ms_acc)

        # Logical row-block this (core, step) owns; `rem` = valid rows in it.
        blk = pl.program_id(0) * steps + i
        rem = rows - blk * r_blk

        @pl.when(rem >= r_blk)
        def _():
            # Fast path (all rows valid): no iota, no compare, no select.
            def body(c, carry):
                sl = pl.ds(pl.multiple_of(c * chunk, chunk), chunk)
                xv = x_ref[sl, :].astype(jnp.float32)
                yv = y_ref[sl, :].astype(jnp.float32)
                mv = m_ref[sl, :].astype(jnp.float32)
                mc = 1.0 - mv
                d = (xv - yv) * mc
                accum(sq_acc, ms_acc, d, mc)
                return carry

            lax.fori_loop(0, n_chunks, body, 0)

        @pl.when(rem < r_blk)
        def _():
            # Tail / clamped-duplicate block: invalid rows are zeroed with
            # selects (NOT multiplies) so OOB NaN/Inf garbage cannot propagate.
            row_ids = lax.broadcasted_iota(jnp.int32, (chunk, LANES), 0)

            def body(c, carry):
                base = c * chunk
                sl = pl.ds(pl.multiple_of(base, chunk), chunk)
                xv = x_ref[sl, :].astype(jnp.float32)
                yv = y_ref[sl, :].astype(jnp.float32)
                mv = m_ref[sl, :].astype(jnp.float32)
                valid = (row_ids + base) < rem
                mc = jnp.where(valid, 1.0 - mv, 0.0)
                d = jnp.where(valid, xv - yv, 0.0) * mc
                accum(sq_acc, ms_acc, d, mc)
                return carry

            lax.fori_loop(0, n_chunks, body, 0)

        @pl.when(i == pl.num_programs(1) - 1)
        def _():
            out_ref[0, 0] = sq_acc[...]
            out_ref[0, 1] = ms_acc[...]

    return kernel


def l2_loss_masked_mean(x, y, mask, *, tile_rows=None, ncores=None):
    """Pallas implementation of L2LossMaskedMean.forward(x, y, mask)."""
    assert x.shape == y.shape == mask.shape
    total = x.size

    auto_tile, auto_cores = _device_defaults()
    tile_rows = auto_tile if tile_rows is None else tile_rows
    ncores = auto_cores if ncores is None else ncores

    xf = x.reshape(-1)
    yf = y.reshape(-1)
    mf = mask.reshape(-1)

    # Pad only up to one 128-lane row (needed for the (rows,128) reshape);
    # padded mask entries are 1 -> masked == 0, contributing nothing to either
    # sum.  Ragged rows within the last block are masked in-kernel, so the
    # full-array pad copy almost never triggers.
    pad = (-total) % LANES
    if pad:
        xf = jnp.pad(xf, (0, pad))
        yf = jnp.pad(yf, (0, pad))
        mf = jnp.pad(mf, (0, pad), constant_values=1)

    rows = (total + pad) // LANES
    xf = xf.reshape(rows, LANES)
    yf = yf.reshape(rows, LANES)
    mf = mf.reshape(rows, LANES)

    if rows >= CHUNK_ROWS:
        tile_rows = max(CHUNK_ROWS, (tile_rows // CHUNK_ROWS) * CHUNK_ROWS)
        r_blk = min(tile_rows, (rows // CHUNK_ROWS) * CHUNK_ROWS)
        chunk = CHUNK_ROWS
    else:
        r_blk = rows
        chunk = rows

    n_blocks = pl.cdiv(rows, r_blk)
    ncores = max(1, min(ncores, n_blocks))   # never more cores than blocks
    steps = pl.cdiv(n_blocks, ncores)

    def in_map(c, i):
        # Clamp: (core, step) pairs past the real data re-read the last block;
        # the kernel's `rem` row-mask zeroes their contribution.
        return (jnp.minimum(c * steps + i, n_blocks - 1), 0)

    tile_spec = pl.BlockSpec((r_blk, LANES), in_map)
    out_spec = pl.BlockSpec((1, 2, SUBLANES, LANES), lambda c, i: (c, 0, 0, 0))

    # Pin the VMEM budget: 3 inputs x 2 pipeline buffers + headroom, capped
    # below v7x's 64 MiB physical VMEM.
    in_row_bytes = LANES * (xf.dtype.itemsize + yf.dtype.itemsize + mf.dtype.itemsize)
    vmem_limit = int(min(56 << 20, 2 * r_blk * in_row_bytes + (16 << 20)))

    cost = pl.CostEstimate(
        flops=8 * total,
        transcendentals=0,
        bytes_accessed=int(xf.nbytes + yf.nbytes + mf.nbytes),
    )

    partials = pl.pallas_call(
        _make_kernel(rows, r_blk, steps, chunk),
        out_shape=jax.ShapeDtypeStruct((ncores, 2, SUBLANES, LANES), jnp.float32),
        grid_spec=pltpu.PrefetchScalarGridSpec(
            num_scalar_prefetch=0,
            grid=(ncores, steps),
            in_specs=[tile_spec, tile_spec, tile_spec],
            out_specs=out_spec,
            scratch_shapes=[
                pltpu.VMEM((SUBLANES, LANES), jnp.float32),
                pltpu.VMEM((SUBLANES, LANES), jnp.float32),
            ],
        ),
        compiler_params=pltpu.CompilerParams(
            # TODO(synk): on v7x, verify the core axis is really sharded across
            # the two TensorCores (else switch it to pltpu.CORE_PARALLEL).
            dimension_semantics=("parallel", "arbitrary"),
            vmem_limit_bytes=vmem_limit,
        ),
        cost_estimate=cost,
    )(xf, yf, mf)

    # Final cross-lane/cross-core reduce on a tiny array (cheap XLA op).
    sums = jnp.sum(partials, axis=(0, 2, 3))  # [sq_sum, masked_sum]
    # NOTE: 0/0 -> NaN when every element is masked, matching PyTorch.
    return sums[0] / sums[1]


def _reference(x, y, mask):
    masked = 1.0 - mask
    l2_sum = jnp.sum((x * masked - y * masked) ** 2)
    return l2_sum / jnp.sum(masked)


if __name__ == "__main__":
    key = jax.random.PRNGKey(0)
    kx, ky, km = jax.random.split(key, 3)

    # Small NCHW-shaped inputs consistent with the module's usage.
    shape = (2, 4, 16, 16)
    x = jax.random.normal(kx, shape, dtype=jnp.float32)
    y = jax.random.normal(ky, shape, dtype=jnp.float32)
    # Binary mask (1 = ignore, 0 = keep), like typical usage of this loss.
    mask = (jax.random.uniform(km, shape) < 0.3).astype(jnp.float32)

    loss = jax.block_until_ready(l2_loss_masked_mean(x, y, mask))
    ref = _reference(x, y, mask)

    assert jnp.allclose(loss, ref, rtol=1e-5, atol=1e-5), (loss, ref)
    print("KERNEL_OK")
</pallas_src>

<mosaic_0001>
module attributes {stable_mosaic.version = 11 : i64} {
  func.func @kernel(%arg0: i32, %arg1: i32, %arg2: memref<16x128xf32, #tpu.memory_space<vmem>>, %arg3: memref<16x128xf32, #tpu.memory_space<vmem>>, %arg4: memref<16x128xf32, #tpu.memory_space<vmem>>, %arg5: memref<1x2x8x128xf32, #tpu.memory_space<vmem>>, %arg6: memref<8x128xf32, #tpu.memory_space<vmem>>, %arg7: memref<8x128xf32, #tpu.memory_space<vmem>>) attributes {dimension_semantics = [#tpu.dimension_semantics<parallel>, #tpu.dimension_semantics<arbitrary>], iteration_bounds = array<i64: 1, 1>, scalar_prefetch = 0 : i64, scratch_operands = 2 : i64, tpu.core_type = #tpu.core_type<tc>, window_params = [{transform_indices = @transform_0, window_bounds = array<i64: 16, 128>}, {transform_indices = @transform_1, window_bounds = array<i64: 16, 128>}, {transform_indices = @transform_2, window_bounds = array<i64: 16, 128>}, {transform_indices = @transform_3, window_bounds = array<i64: 1, 2, 8, 128>}]} {
    %c0_i32 = arith.constant 0 : i32
    %0 = arith.cmpi eq, %arg1, %c0_i32 : i32
    %1 = arith.extui %0 : i1 to i32
    %c0_i32_0 = arith.constant 0 : i32
    %2 = arith.cmpi ne, %1, %c0_i32_0 : i32
    scf.if %2 {
      %cst = arith.constant 0.000000e+00 : f32
      %16 = vector.broadcast %cst : f32 to vector<8x128xf32>
      %c0 = arith.constant 0 : index
      %c0_8 = arith.constant 0 : index
      %17 = vector.load %arg6[%c0, %c0_8] : memref<8x128xf32, #tpu.memory_space<vmem>>, vector<8x128xf32>
      tpu.vector_store %arg6[%c0, %c0_8], %16 {strides = array<i32>} : memref<8x128xf32, #tpu.memory_space<vmem>>, vector<8x128xf32>,
      %cst_9 = arith.constant 0.000000e+00 : f32
      %18 = vector.broadcast %cst_9 : f32 to vector<8x128xf32>
      %c0_10 = arith.constant 0 : index
      %c0_11 = arith.constant 0 : index
      %19 = vector.load %arg7[%c0_10, %c0_11] : memref<8x128xf32, #tpu.memory_space<vmem>>, vector<8x128xf32>
      tpu.vector_store %arg7[%c0_10, %c0_11], %18 {strides = array<i32>} : memref<8x128xf32, #tpu.memory_space<vmem>>, vector<8x128xf32>,
    } else {
    }
    %c1_i32 = arith.constant 1 : i32
    %3 = arith.muli %arg0, %c1_i32 : i32
    %4 = arith.addi %3, %arg1 : i32
    %c16_i32 = arith.constant 16 : i32
    %5 = arith.muli %4, %c16_i32 : i32
    %c16_i32_1 = arith.constant 16 : i32
    %6 = arith.subi %c16_i32_1, %5 : i32
    %c16_i32_2 = arith.constant 16 : i32
    %7 = arith.cmpi sge, %6, %c16_i32_2 : i32
    %8 = arith.extui %7 : i1 to i32
    %c0_i32_3 = arith.constant 0 : i32
    %9 = arith.cmpi ne, %8, %c0_i32_3 : i32
    scf.if %9 {
      %c0_i32_8 = arith.constant 0 : i32
      %c16_i32_9 = arith.constant 16 : i32
      %16 = arith.muli %c0_i32_8, %c16_i32_9 : i32
      %17 = tpu.assume_multiple %16, 16 : i32
      %18 = arith.index_cast %17 : i32 to index
      %c0 = arith.constant 0 : index
      %19 = vector.load %arg2[%18, %c0] : memref<16x128xf32, #tpu.memory_space<vmem>>, vector<16x128xf32>
      %20 = arith.index_cast %17 : i32 to index
      %c0_10 = arith.constant 0 : index
      %21 = vector.load %arg3[%20, %c0_10] : memref<16x128xf32, #tpu.memory_space<vmem>>, vector<16x128xf32>
      %22 = arith.index_cast %17 : i32 to index
      %c0_11 = arith.constant 0 : index
      %23 = vector.load %arg4[%22, %c0_11] : memref<16x128xf32, #tpu.memory_space<vmem>>, vector<16x128xf32>
      %cst = arith.constant 1.000000e+00 : f32
      %24 = vector.broadcast %cst : f32 to vector<16x128xf32>
      %25 = arith.subf %24, %23 : vector<16x128xf32>
      %26 = arith.subf %19, %21 : vector<16x128xf32>
      %27 = arith.mulf %26, %25 : vector<16x128xf32>
      %c0_12 = arith.constant 0 : index
      %c0_13 = arith.constant 0 : index
      %28 = vector.load %arg6[%c0_12, %c0_13] : memref<8x128xf32, #tpu.memory_space<vmem>>, vector<8x128xf32>
      %29 = arith.mulf %27, %27 : vector<16x128xf32>
      %30 = vector.shape_cast %29 : vector<16x128xf32> to vector<2x8x128xf32>
      %cst_14 = arith.constant dense<0.000000e+00> : vector<8x128xf32>
      %31 = vector.multi_reduction <add>, %30, %cst_14 [0] : vector<2x8x128xf32> to vector<8x128xf32>
      %32 = arith.addf %28, %31 : vector<8x128xf32>
      %c0_15 = arith.constant 0 : index
      %c0_16 = arith.constant 0 : index
      %33 = vector.load %arg6[%c0_15, %c0_16] : memref<8x128xf32, #tpu.memory_space<vmem>>, vector<8x128xf32>
      tpu.vector_store %arg6[%c0_15, %c0_16], %32 {strides = array<i32>} : memref<8x128xf32, #tpu.memory_space<vmem>>, vector<8x128xf32>,
      %c0_17 = arith.constant 0 : index
      %c0_18 = arith.constant 0 : index
      %34 = vector.load %arg7[%c0_17, %c0_18] : memref<8x128xf32, #tpu.memory_space<vmem>>, vector<8x128xf32>
      %35 = vector.shape_cast %25 : vector<16x128xf32> to vector<2x8x128xf32>
      %cst_19 = arith.constant dense<0.000000e+00> : vector<8x128xf32>
      %36 = vector.multi_reduction <add>, %35, %cst_19 [0] : vector<2x8x128xf32> to vector<8x128xf32>
      %37 = arith.addf %34, %36 : vector<8x128xf32>
      %c0_20 = arith.constant 0 : index
      %c0_21 = arith.constant 0 : index
      %38 = vector.load %arg7[%c0_20, %c0_21] : memref<8x128xf32, #tpu.memory_space<vmem>>, vector<8x128xf32>
      tpu.vector_store %arg7[%c0_20, %c0_21], %37 {strides = array<i32>} : memref<8x128xf32, #tpu.memory_space<vmem>>, vector<8x128xf32>,
      %c1_i32_22 = arith.constant 1 : i32
    } else {
    }
    %c16_i32_4 = arith.constant 16 : i32
    %10 = arith.cmpi slt, %6, %c16_i32_4 : i32
    %11 = arith.extui %10 : i1 to i32
    %c0_i32_5 = arith.constant 0 : i32
    %12 = arith.cmpi ne, %11, %c0_i32_5 : i32
    scf.if %12 {
      %16 = tpu.iota {dimensions = array<i32: 0>} : vector<16x128xi32>
      %c0_i32_8 = arith.constant 0 : i32
      %c16_i32_9 = arith.constant 16 : i32
      %17 = arith.muli %c0_i32_8, %c16_i32_9 : i32
      %18 = tpu.assume_multiple %17, 16 : i32
      %19 = arith.index_cast %18 : i32 to index
      %c0 = arith.constant 0 : index
      %20 = vector.load %arg2[%19, %c0] : memref<16x128xf32, #tpu.memory_space<vmem>>, vector<16x128xf32>
      %21 = arith.index_cast %18 : i32 to index
      %c0_10 = arith.constant 0 : index
      %22 = vector.load %arg3[%21, %c0_10] : memref<16x128xf32, #tpu.memory_space<vmem>>, vector<16x128xf32>
      %23 = arith.index_cast %18 : i32 to index
      %c0_11 = arith.constant 0 : index
      %24 = vector.load %arg4[%23, %c0_11] : memref<16x128xf32, #tpu.memory_space<vmem>>, vector<16x128xf32>
      %25 = vector.broadcast %17 : i32 to vector<16x128xi32>
      %26 = arith.addi %16, %25 : vector<16x128xi32>
      %27 = vector.broadcast %6 : i32 to vector<16x128xi32>
      %28 = arith.cmpi slt, %26, %27 : vector<16x128xi32>
      %cst = arith.constant 1.000000e+00 : f32
      %29 = vector.broadcast %cst : f32 to vector<16x128xf32>
      %30 = arith.subf %29, %24 : vector<16x128xf32>
      %cst_12 = arith.constant 0.000000e+00 : f32
      %31 = vector.broadcast %cst_12 : f32 to vector<16x128xf32>
      %32 = arith.select %28, %30, %31 : vector<16x128xi1>, vector<16x128xf32>
      %33 = arith.subf %20, %22 : vector<16x128xf32>
      %cst_13 = arith.constant 0.000000e+00 : f32
      %34 = vector.broadcast %cst_13 : f32 to vector<16x128xf32>
      %35 = arith.select %28, %33, %34 : vector<16x128xi1>, vector<16x128xf32>
      %36 = arith.mulf %35, %32 : vector<16x128xf32>
      %c0_14 = arith.constant 0 : index
      %c0_15 = arith.constant 0 : index
      %37 = vector.load %arg6[%c0_14, %c0_15] : memref<8x128xf32, #tpu.memory_space<vmem>>, vector<8x128xf32>
      %38 = arith.mulf %36, %36 : vector<16x128xf32>
      %39 = vector.shape_cast %38 : vector<16x128xf32> to vector<2x8x128xf32>
      %cst_16 = arith.constant dense<0.000000e+00> : vector<8x128xf32>
      %40 = vector.multi_reduction <add>, %39, %cst_16 [0] : vector<2x8x128xf32> to vector<8x128xf32>
      %41 = arith.addf %37, %40 : vector<8x128xf32>
      %c0_17 = arith.constant 0 : index
      %c0_18 = arith.constant 0 : index
      %42 = vector.load %arg6[%c0_17, %c0_18] : memref<8x128xf32, #tpu.memory_space<vmem>>, vector<8x128xf32>
      tpu.vector_store %arg6[%c0_17, %c0_18], %41 {strides = array<i32>} : memref<8x128xf32, #tpu.memory_space<vmem>>, vector<8x128xf32>,
      %c0_19 = arith.constant 0 : index
      %c0_20 = arith.constant 0 : index
      %43 = vector.load %arg7[%c0_19, %c0_20] : memref<8x128xf32, #tpu.memory_space<vmem>>, vector<8x128xf32>
      %44 = vector.shape_cast %32 : vector<16x128xf32> to vector<2x8x128xf32>
      %cst_21 = arith.constant dense<0.000000e+00> : vector<8x128xf32>
      %45 = vector.multi_reduction <add>, %44, %cst_21 [0] : vector<2x8x128xf32> to vector<8x128xf32>
      %46 = arith.addf %43, %45 : vector<8x128xf32>
      %c0_22 = arith.constant 0 : index
      %c0_23 = arith.constant 0 : index
      %47 = vector.load %arg7[%c0_22, %c0_23] : memref<8x128xf32, #tpu.memory_space<vmem>>, vector<8x128xf32>
      tpu.vector_store %arg7[%c0_22, %c0_23], %46 {strides = array<i32>} : memref<8x128xf32, #tpu.memory_space<vmem>>, vector<8x128xf32>,
      %c1_i32_24 = arith.constant 1 : i32
    } else {
    }
    %c0_i32_6 = arith.constant 0 : i32
    %13 = arith.cmpi eq, %arg1, %c0_i32_6 : i32
    %14 = arith.extui %13 : i1 to i32
    %c0_i32_7 = arith.constant 0 : i32
    %15 = arith.cmpi ne, %14, %c0_i32_7 : i32
    scf.if %15 {
      %c0 = arith.constant 0 : index
      %c0_8 = arith.constant 0 : index
      %16 = vector.load %arg6[%c0, %c0_8] : memref<8x128xf32, #tpu.memory_space<vmem>>, vector<8x128xf32>
      %c0_9 = arith.constant 0 : index
      %c0_10 = arith.constant 0 : index
      %c0_11 = arith.constant 0 : index
      %c0_12 = arith.constant 0 : index
      %17 = vector.load %arg5[%c0_9, %c0_10, %c0_11, %c0_12] : memref<1x2x8x128xf32, #tpu.memory_space<vmem>>, vector<1x1x8x128xf32>
      %18 = vector.shape_cast %17 : vector<1x1x8x128xf32> to vector<8x128xf32>
      %19 = vector.shape_cast %16 : vector<8x128xf32> to vector<1x1x8x128xf32>
      tpu.vector_store %arg5[%c0_9, %c0_10, %c0_11, %c0_12], %19 {strides = array<i32>} : memref<1x2x8x128xf32, #tpu.memory_space<vmem>>, vector<1x1x8x128xf32>,
      %c0_13 = arith.constant 0 : index
      %c0_14 = arith.constant 0 : index
      %20 = vector.load %arg7[%c0_13, %c0_14] : memref<8x128xf32, #tpu.memory_space<vmem>>, vector<8x128xf32>
      %c0_15 = arith.constant 0 : index
      %c1 = arith.constant 1 : index
      %c0_16 = arith.constant 0 : index
      %c0_17 = arith.constant 0 : index
      %21 = vector.load %arg5[%c0_15, %c1, %c0_16, %c0_17] : memref<1x2x8x128xf32, #tpu.memory_space<vmem>>, vector<1x1x8x128xf32>
      %22 = vector.shape_cast %21 : vector<1x1x8x128xf32> to vector<8x128xf32>
      %23 = vector.shape_cast %20 : vector<8x128xf32> to vector<1x1x8x128xf32>
      tpu.vector_store %arg5[%c0_15, %c1, %c0_16, %c0_17], %23 {strides = array<i32>} : memref<1x2x8x128xf32, #tpu.memory_space<vmem>>, vector<1x1x8x128xf32>,
    } else {
    }
    return
  }
  func.func @transform_0(%arg0: i32, %arg1: i32) -> (i32, i32) {
    %c1_i32 = arith.constant 1 : i32
    %0 = arith.muli %arg0, %c1_i32 : i32
    %1 = arith.addi %0, %arg1 : i32
    %c0_i32 = arith.constant 0 : i32
    %2 = arith.minsi %1, %c0_i32 : i32
    %c0_i32_0 = arith.constant 0 : i32
    %c0_i32_1 = arith.constant 0 : i32
    return %2, %c0_i32_0 : i32, i32
  }
  func.func @transform_1(%arg0: i32, %arg1: i32) -> (i32, i32) {
    %c1_i32 = arith.constant 1 : i32
    %0 = arith.muli %arg0, %c1_i32 : i32
    %1 = arith.addi %0, %arg1 : i32
    %c0_i32 = arith.constant 0 : i32
    %2 = arith.minsi %1, %c0_i32 : i32
    %c0_i32_0 = arith.constant 0 : i32
    %c0_i32_1 = arith.constant 0 : i32
    return %2, %c0_i32_0 : i32, i32
  }
  func.func @transform_2(%arg0: i32, %arg1: i32) -> (i32, i32) {
    %c1_i32 = arith.constant 1 : i32
    %0 = arith.muli %arg0, %c1_i32 : i32
    %1 = arith.addi %0, %arg1 : i32
    %c0_i32 = arith.constant 0 : i32
    %2 = arith.minsi %1, %c0_i32 : i32
    %c0_i32_0 = arith.constant 0 : i32
    %c0_i32_1 = arith.constant 0 : i32
    return %2, %c0_i32_0 : i32, i32
  }
  func.func @transform_3(%arg0: i32, %arg1: i32) -> (i32, i32, i32, i32) {
    %c0_i32 = arith.constant 0 : i32
    %c0_i32_0 = arith.constant 0 : i32
    %c0_i32_1 = arith.constant 0 : i32
    %c0_i32_2 = arith.constant 0 : i32
    return %arg0, %c0_i32, %c0_i32_0, %c0_i32_1 : i32, i32, i32, i32
  }
}

</mosaic_0001>

<llo_original>
// kernel: tpu_custom_call.1
$region0: #{tpu_custom_call.1}
  #allocation0 [shape = 'u32[]', space=smem, size = 0x4, offset = 0x4, fixed_abs, tag = 'smem constant byte address 0x4 - core index']
  #allocation1 [shape = 'u32[144,128]{1,0:T(1,128)}', space=vmem, size = 0x12000, scoped, tag = 'internal scratch']
  #allocation2 [shape = 'f32[8,128]{1,0:T(8,128)}', space=vmem, size = 0x1000, scoped, tag = 'scratch operand']
  #allocation3 [shape = 'f32[8,128]{1,0:T(8,128)}', space=vmem, size = 0x1000, scoped, tag = 'scratch operand']
  %s0 = inlined_call_operand.hbm [shape: f32[16,128], index: 0, kind: input, shape index: {}]
  %s1 = inlined_call_operand.hbm [shape: f32[16,128], index: 1, kind: input, shape index: {}]
  %s2 = inlined_call_operand.hbm [shape: f32[16,128], index: 2, kind: input, shape index: {}]
  %s3 = inlined_call_operand.hbm [shape: f32[1,2,8,128], index: 3, kind: output, shape index: {}]
  %s4 = sld [smem:[#allocation0]]
  $region50: #{tpu_custom_call.1} parent=0
    _
  %s6 = ssub.s32 1, %s4
  %s7 = scalar_select 0, %s6, %s4
  $region1: #{tpu_custom_call.1} parent=0
    #allocation4 [shape = 'u8[8192]{0}', space=vmem, size = 0x2000, scoped, tag = 'input window, operand 0, single buffered']
    #allocation5 [shape = 's32[1]{0}', space=sflag, size = 0x4, scoped, tag = 'scoped memory for tpu_custom_call.1']
    #allocation6 [shape = 's32[1]{0}', space=sflag, size = 0x4, scoped, tag = 'scoped memory for tpu_custom_call.1']
    #allocation7 [shape = 'u8[8192]{0}', space=vmem, size = 0x2000, scoped, tag = 'input window, operand 1, single buffered']
    #allocation8 [shape = 's32[1]{0}', space=sflag, size = 0x4, scoped, tag = 'scoped memory for tpu_custom_call.1']
    #allocation9 [shape = 'u8[8192]{0}', space=vmem, size = 0x2000, scoped, tag = 'input window, operand 2, single buffered']
    #allocation10 [shape = 'u8[8192]{0}', space=vmem, size = 0x2000, scoped, tag = 'output window, operand 0, single buffered']
    %8 = vsyncpa [#allocation5], 0
    %9 = vsyncpa [#allocation8], 0
    %10 = vsyncpa [#allocation6], 0
    // Predicated region
    $region2: #{tpu_custom_call.1} parent=1 // pred_check
      _
    $region3: #{tpu_custom_call.1} parent=1 // pred_check_branch
      %12 = sbr.rel (0) target = $region5
    $region4: #{tpu_custom_call.1} parent=1 // pred_region
      %s13 = sadd.s32 0, 0
      %p14 = scmp.lt.s32.totalorder %s13, 0
      %s15 = scalar_select %p14, %s13, 0
      %s16 = smul.u32 2, %s15
      %s18 = ssub.s32 256, 256
      %19 = vsyncadd [#allocation5], %s18
      %s20 = smul.addr %s16, 128
      %s21 = scalar_lea.hbm %s0, %s20
      %s22 = sshll.u32 [#allocation4], 4
      %s23 = int_to_ptr.vmem [resolvable:$true] %s22
      %28 = dma.hbm_to_vmem [thread:$0]  %s21, 256, %s23, [#allocation5], 128, 128, 8
    $region5: #{tpu_custom_call.1} parent=1 // pred_fallthru
      _
    // Predicated region
    $region6: #{tpu_custom_call.1} parent=1 // pred_check
      _
    $region7: #{tpu_custom_call.1} parent=1 // pred_check_branch
      %30 = sbr.rel (0) target = $region9
    $region8: #{tpu_custom_call.1} parent=1 // pred_region
      %s31 = sadd.s32 0, 0
      %p32 = scmp.lt.s32.totalorder %s31, 0
      %s33 = scalar_select %p32, %s31, 0
      %s34 = smul.u32 2, %s33
      %s36 = ssub.s32 256, 256
      %37 = vsyncadd [#allocation8], %s36
      %s38 = smul.addr %s34, 128
      %s39 = scalar_lea.hbm %s1, %s38
      %s40 = sshll.u32 [#allocation7], 4
      %s41 = int_to_ptr.vmem [resolvable:$true] %s40
      %46 = dma.hbm_to_vmem [thread:$0]  %s39, 256, %s41, [#allocation8], 128, 128, 8
    $region9: #{tpu_custom_call.1} parent=1 // pred_fallthru
      _
    // Predicated region
    $region10: #{tpu_custom_call.1} parent=1 // pred_check
      _
    $region11: #{tpu_custom_call.1} parent=1 // pred_check_branch
      %48 = sbr.rel (0) target = $region13
    $region12: #{tpu_custom_call.1} parent=1 // pred_region
      %s49 = sadd.s32 0, 0
      %p50 = scmp.lt.s32.totalorder %s49, 0
      %s51 = scalar_select %p50, %s49, 0
      %s52 = smul.u32 2, %s51
      %s54 = ssub.s32 256, 256
      %55 = vsyncadd [#allocation8], %s54
      %s56 = smul.addr %s52, 128
      %s57 = scalar_lea.hbm %s2, %s56
      %s58 = sshll.u32 [#allocation9], 4
      %s59 = int_to_ptr.vmem [resolvable:$true] %s58
      %64 = dma.hbm_to_vmem [thread:$0]  %s57, 256, %s59, [#allocation8], 128, 128, 8
    $region13: #{tpu_custom_call.1} parent=1 // pred_fallthru
      _
    // Predicated region
    $region14: #{tpu_custom_call.1} parent=1 // pred_check
      _
    $region15: #{tpu_custom_call.1} parent=1 // pred_check_branch
      %66 = sbr.rel (0) target = $region17
    $region16: #{tpu_custom_call.1} parent=1 // pred_region
      %67 = dma.done [#allocation5], 256
    $region17: #{tpu_custom_call.1} parent=1 // pred_fallthru
      _
    // Predicated region
    $region18: #{tpu_custom_call.1} parent=1 // pred_check
      _
    $region19: #{tpu_custom_call.1} parent=1 // pred_check_branch
      %69 = sbr.rel (0) target = $region21
    $region20: #{tpu_custom_call.1} parent=1 // pred_region
      %70 = dma.done [#allocation8], 256
    $region21: #{tpu_custom_call.1} parent=1 // pred_fallthru
      _
    // Predicated region
    $region22: #{tpu_custom_call.1} parent=1 // pred_check
      _
    $region23: #{tpu_custom_call.1} parent=1 // pred_check_branch
      %72 = sbr.rel (0) target = $region25
    $region24: #{tpu_custom_call.1} parent=1 // pred_region
      %73 = dma.done [#allocation8], 256
    $region25: #{tpu_custom_call.1} parent=1 // pred_fallthru
      _
    %s74 = sadd.s32 0, 0
    %p75 = scmp.lt.s32.totalorder %s74, 0
    %s76 = scalar_select %p75, %s74, 0
    %s77 = smul.u32 2, %s76
    %s78 = sadd.s32 0, 0
    %p79 = scmp.lt.s32.totalorder %s78, 0
    %s80 = scalar_select %p79, %s78, 0
    %s81 = smul.u32 2, %s80
    %s82 = sadd.s32 0, 0
    %p83 = scmp.lt.s32.totalorder %s82, 0
    %s84 = scalar_select %p83, %s82, 0
    %s85 = smul.u32 2, %s84
    %p86 = scmp.eq.s32.totalorder 0, 0
    // Predicated region
    $region26: #{tpu_custom_call.1} parent=1 // pred_check
      %p87 = pneg %p86
    $region27: #{tpu_custom_call.1} parent=1 // pred_check_branch
      %89 = sbr.rel (%p87) target = $region29
    $region28: #{tpu_custom_call.1} parent=1 // pred_region
      %90 = vst [vmem:[#allocation2] sm:$0xff] 0.0
      %91 = vst [vmem:[#allocation3] sm:$0xff] 0.0
    $region29: #{tpu_custom_call.1} parent=1 // pred_fallthru
      _
    %s92 = sadd.s32 0, 0
    %s93 = smul.u32 %s92, 16
    %s94 = ssub.s32 16, %s93
    %p95 = scmp.ge.s32.totalorder %s94, 16
    // Predicated region
    $region30: #{tpu_custom_call.1} parent=1 // pred_check
      %p96 = pneg %p95
    $region31: #{tpu_custom_call.1} parent=1 // pred_check_branch
      %98 = sbr.rel (%p96) target = $region33
    $region32: #{tpu_custom_call.1} parent=1 // pred_region
      %v99 = vld [vmem:[#allocation4] sm:$0xff]
      %v100 = vld [vmem:[#allocation4 + $0x8] sm:$0xff]
      %v101 = vld [vmem:[#allocation7] sm:$0xff]
      %v102 = vld [vmem:[#allocation7 + $0x8] sm:$0xff]
      %v103 = vld [vmem:[#allocation9] sm:$0xff]
      %v104 = vld [vmem:[#allocation9 + $0x8] sm:$0xff]
      %v105 = vsub.f32 1.0, %v103
      %v106 = vsub.f32 1.0, %v104
      %v107 = vsub.f32 %v99, %v101
      %v108 = vsub.f32 %v100, %v102
      %v109 = vmul.f32 %v107, %v105
      %v110 = vmul.f32 %v108, %v106
      %v111 = vld [vmem:[#allocation2] sm:$0xff]
      %v112 = vmul.f32 %v109, %v109
      %v113 = vmul.f32 %v110, %v110
      %v114 = vadd.f32 %v112, %v113
      %v115 = vadd.f32 %v111, %v114
      %116 = vst [vmem:[#allocation2] sm:$0xff] %v115
      %v117 = vld [vmem:[#allocation3] sm:$0xff]
      %v118 = vadd.f32 %v105, %v106
      %v119 = vadd.f32 %v117, %v118
      %120 = vst [vmem:[#allocation3] sm:$0xff] %v119
    $region33: #{tpu_custom_call.1} parent=1 // pred_fallthru
      _
    %p121 = scmp.lt.s32.totalorder %s94, 16
    // Predicated region
    $region34: #{tpu_custom_call.1} parent=1 // pred_check
      %p122 = pneg %p121
    $region35: #{tpu_custom_call.1} parent=1 // pred_check_branch
      %124 = sbr.rel (%p122) target = $region37
    $region36: #{tpu_custom_call.1} parent=1 // pred_region
      %v125 = vlaneseq
      %v126 = vshrl.u32 %v125, 7
      %v127 = vadd.s32 %v126, 8
      %v128 = vld [vmem:[#allocation4] sm:$0xff]
      %v129 = vld [vmem:[#allocation4 + $0x8] sm:$0xff]
      %v130 = vld [vmem:[#allocation7] sm:$0xff]
      %v131 = vld [vmem:[#allocation7 + $0x8] sm:$0xff]
      %v132 = vld [vmem:[#allocation9] sm:$0xff]
      %v133 = vld [vmem:[#allocation9 + $0x8] sm:$0xff]
      %v134 = vstv %s94
      %vm135 = vcmp.lt.s32.totalorder %v126, %v134
      %vm136 = vcmp.lt.s32.totalorder %v127, %v134
      %v137 = vsub.f32 1.0, %v132
      %v138 = vsub.f32 1.0, %v133
      %v139 = vsel %vm135, %v137, 0.0
      %v140 = vsel %vm136, %v138, 0.0
      %v141 = vsub.f32 %v128, %v130
      %v142 = vsub.f32 %v129, %v131
      %v143 = vsel %vm135, %v141, 0.0
      %v144 = vsel %vm136, %v142, 0.0
      %v145 = vmul.f32 %v143, %v139
      %v146 = vmul.f32 %v144, %v140
      %v147 = vld [vmem:[#allocation2] sm:$0xff]
      %v148 = vmul.f32 %v145, %v145
      %v149 = vmul.f32 %v146, %v146
      %v150 = vadd.f32 %v148, %v149
      %v151 = vadd.f32 %v147, %v150
      %152 = vst [vmem:[#allocation2] sm:$0xff] %v151
      %v153 = vld [vmem:[#allocation3] sm:$0xff]
      %v154 = vadd.f32 %v139, %v140
      %v155 = vadd.f32 %v153, %v154
      %156 = vst [vmem:[#allocation3] sm:$0xff] %v155
    $region37: #{tpu_custom_call.1} parent=1 // pred_fallthru
      _
    // Predicated region
    $region38: #{tpu_custom_call.1} parent=1 // pred_check
      %p157 = pneg %p86
    $region39: #{tpu_custom_call.1} parent=1 // pred_check_branch
      %159 = sbr.rel (%p157) target = $region41
    $region40: #{tpu_custom_call.1} parent=1 // pred_region
      %v160 = vld [vmem:[#allocation2] sm:$0xff]
      %161 = vst [vmem:[#allocation10] sm:$0xff] %v160
      %v162 = vld [vmem:[#allocation3] sm:$0xff]
      %s163 = scalar_lea.vmem [#allocation10], 8
      %164 = vst [vmem:[%s163] sm:$0xff] %v162
    $region41: #{tpu_custom_call.1} parent=1 // pred_fallthru
      _
    // Predicated region
    $region42: #{tpu_custom_call.1} parent=1 // pred_check
      _
    $region43: #{tpu_custom_call.1} parent=1 // pred_check_branch
      %166 = sbr.rel (0) target = $region45
    $region44: #{tpu_custom_call.1} parent=1 // pred_region
      %s168 = ssub.s32 256, 256
      %169 = vsyncadd [#allocation6], %s168
      %s170 = sshll.u32 [#allocation10], 4
      %s171 = int_to_ptr.vmem [resolvable:$true] %s170
      %176 = dma.vmem_to_hbm [thread:$0]  %s171, 256, %s3, [#allocation6], 128, 128, 8
    $region45: #{tpu_custom_call.1} parent=1 // pred_fallthru
      _
    // Predicated region
    $region46: #{tpu_custom_call.1} parent=1 // pred_check
      _
    $region47: #{tpu_custom_call.1} parent=1 // pred_check_branch
      %178 = sbr.rel (0) target = $region49
    $region48: #{tpu_custom_call.1} parent=1 // pred_region
      %179 = dma.done [#allocation6], 256
    $region49: #{tpu_custom_call.1} parent=1 // pred_fallthru
      _
    %180 = vsyncpa [#allocation5], 1
    %181 = vsyncpa [#allocation8], 1
    %182 = vsyncpa [#allocation6], 1

</llo_original>
